<compile_context>
chip_gen: v5e
topology: v5e:2x2
jax: 0.10.0
libtpu: 0.0.40
codegen_flags: <defaults>
</compile_context>

<pallas_src>
import jax
import jax.numpy as jnp
from jax.experimental import pallas as pl
from jax.experimental.pallas import tpu as pltpu

# KarateClub-like sizes: 34 nodes, 34 one-hot features, hidden=3, 4 classes.
NUM_NODES = 34
NUM_FEATURES = 34
HIDDEN = 3
NUM_COUNTRIES = 4

# Padded / packed layout constants.
NP = 40          # node rows padded to a multiple of 8 (sublanes)
KP = 128         # contraction dims (nodes / features) padded to lane width
LANES = 128
Z_OFF = HIDDEN   # output slab: lanes [0:3] = h, lanes [3:3+4] = z
ROW_W2 = 40      # wslab rows 40, 48, 56 hold W2[0,:], W2[1,:], W2[2,:]
ROW_B1 = 64      # wslab row 64 holds b1 (lanes 0:3)
ROW_B2 = 72      # wslab row 72 holds b2 (lanes 3:7)

# --- Static packing invariants (the single-slab trick depends on these). ---
assert NP % 8 == 0 and NP >= NUM_NODES
assert KP == 128 and LANES == 128
assert Z_OFF == HIDDEN and HIDDEN + NUM_COUNTRIES <= LANES
# Stash rows must land in the zero-padded contraction range of A_hat / X.
assert ROW_W2 >= max(NUM_NODES, NUM_FEATURES)
assert ROW_B1 == ROW_W2 + 8 * HIDDEN          # concat layout of build_wslab
assert ROW_B2 == ROW_B1 + 8 and ROW_B2 < KP
assert ROW_W2 + 8 * (HIDDEN - 1) < ROW_B1


def _epilogue(g, slab_ref):
    """g: (NP, LANES) with A_hat @ (X @ W1) in lanes 0:HIDDEN, zeros elsewhere."""
    # Bias + ReLU: full-tile VPU ops; padding lanes stay exactly zero.
    h = jnp.maximum(g + slab_ref[NP + ROW_B1, :][None, :], 0.0)
    # Linear(3 -> 4) on the VPU: b2 broadcast init + HIDDEN broadcast-FMAs
    # (no zeros splat, no K=3 MXU pass whose contraction is >97% padding).
    z = jnp.broadcast_to(slab_ref[NP + ROW_B2, :][None, :], g.shape)
    for j in range(HIDDEN):                                   # static unroll
        z = z + h[:, j:j + 1] * slab_ref[NP + ROW_W2 + 8 * j, :][None, :]
    # h occupies lanes 0:3, z occupies lanes 3:7 -> one lane-dense slab.
    return h + z


def gcn_kernel_fused(slab_ref, o_ref):
    # slab rows 0:NP = padded A_hat, rows NP:NP+KP = parameter slab (top rows
    # already hold X @ W1, precomputed in the wrapper).  Static, tile-aligned
    # slices of the single VMEM ref -> no extra DMAs, one MXU pass total.
    a = slab_ref[:NP, :]
    w = slab_ref[NP:NP + KP, :]
    g = jnp.dot(a, w, preferred_element_type=jnp.float32)
    o_ref[...] = _epilogue(g, slab_ref).astype(o_ref.dtype)


def gcn_kernel_general(slab_ref, o_ref):
    # Truly-dynamic-X path: slab rows NP+KP:NP+2*KP additionally hold padded X.
    a = slab_ref[:NP, :]
    w = slab_ref[NP:NP + KP, :]
    xp = slab_ref[NP + KP:NP + 2 * KP, :]
    xw = jnp.dot(xp, w, preferred_element_type=jnp.float32)
    g = jnp.dot(a, xw, preferred_element_type=jnp.float32)
    o_ref[...] = _epilogue(g, slab_ref).astype(o_ref.dtype)


# ---------- One-time (init) packing helpers: pad + concatenate, no per-call
# ---------- scatter prologue in the jitted hot path.

def build_wslab(w1, b1, w2, b2, xw1=None):
    """Pack parameters into one (KP, LANES) f32 slab.

    Rows 0:34  lanes 0:3  -> X @ W1 (== W1 when X is the one-hot identity)
    Rows 40/48/56 lanes 3:7 -> W2[0/1/2, :]
    Row  64    lanes 0:3  -> b1
    Row  72    lanes 3:7  -> b2
    """
    top = jnp.asarray(w1 if xw1 is None else xw1, jnp.float32)
    top = jnp.pad(top, ((0, ROW_W2 - top.shape[0]), (0, LANES - HIDDEN)))
    w2_blk = jnp.zeros((HIDDEN, 8, LANES), jnp.float32)
    w2_blk = w2_blk.at[:, 0, Z_OFF:Z_OFF + NUM_COUNTRIES].set(
        jnp.asarray(w2, jnp.float32))
    w2_blk = w2_blk.reshape(HIDDEN * 8, LANES)
    b1_blk = jnp.zeros((ROW_B2 - ROW_B1, LANES), jnp.float32)
    b1_blk = b1_blk.at[0, :HIDDEN].set(jnp.asarray(b1, jnp.float32).reshape(-1))
    b2_blk = jnp.zeros((KP - ROW_B2, LANES), jnp.float32)
    b2_blk = b2_blk.at[0, Z_OFF:Z_OFF + NUM_COUNTRIES].set(
        jnp.asarray(b2, jnp.float32).reshape(-1))
    return jnp.concatenate([top, w2_blk, b1_blk, b2_blk], axis=0)


def pad_a_hat(a_hat):
    n = a_hat.shape[0]
    return jnp.pad(a_hat.astype(jnp.float32), ((0, NP - n), (0, KP - n)))


def pad_x(x):
    n, f = x.shape
    return jnp.pad(x.astype(jnp.float32), ((0, KP - n), (0, KP - f)))


_VMEM = pl.BlockSpec(memory_space=pltpu.MemorySpace.VMEM)
_OUT_SHAPE = jax.ShapeDtypeStruct((NP, LANES), jnp.float32)


@jax.jit
def gcn_forward_fused(slab):
    """slab: (NP + KP, LANES) = [a_pad ; wslab].  Returns (34, 7) = [h | z]."""
    out = pl.pallas_call(
        gcn_kernel_fused,
        out_shape=_OUT_SHAPE,
        in_specs=[_VMEM],
        out_specs=_VMEM,
    )(slab)
    return out[:NUM_NODES, :HIDDEN + NUM_COUNTRIES]   # single combined slice


@jax.jit
def gcn_forward_general(slab):
    """slab: (NP + 2*KP, LANES) = [a_pad ; wslab ; x_pad] for dynamic X."""
    out = pl.pallas_call(
        gcn_kernel_general,
        out_shape=_OUT_SHAPE,
        in_specs=[_VMEM],
        out_specs=_VMEM,
    )(slab)
    return out[:NUM_NODES, :HIDDEN + NUM_COUNTRIES]


# ---------- Graph construction (plain JAX glue, done once at init). ----------

def build_norm_adj(edge_index, num_nodes):
    """Dense D^-1/2 (A + I) D^-1/2, matching PyG GCNConv normalization."""
    # TODO(synk): sparse scatter-based message passing has no clean small-N
    # Pallas equivalent; the dense normalized adjacency is built once in JAX.
    src, dst = edge_index[0], edge_index[1]
    loop = jnp.arange(num_nodes, dtype=src.dtype)
    src = jnp.concatenate([src, loop])
    dst = jnp.concatenate([dst, loop])
    A = jnp.zeros((num_nodes, num_nodes), jnp.float32).at[dst, src].add(1.0)
    deg = A.sum(axis=1)
    dinv = jnp.where(deg > 0, 1.0 / jnp.sqrt(deg), 0.0)
    return dinv[:, None] * A * dinv[None, :]


def make_edge_index(num_nodes):
    """Deterministic small undirected graph: ring + a few chords."""
    edges = []
    for i in range(num_nodes):
        j = (i + 1) % num_nodes
        edges.append((i, j))
        edges.append((j, i))
    for i in range(0, num_nodes, 5):
        j = (i + num_nodes // 2) % num_nodes
        edges.append((i, j))
        edges.append((j, i))
    return jnp.array(edges, dtype=jnp.int32).T  # (2, E)


if __name__ == "__main__":
    key = jax.random.PRNGKey(0)
    k1, k2, k3, k4, k5 = jax.random.split(key, 5)

    # Node features: identity one-hot (as in KarateClub) -> (34, 34).
    x_id = jnp.eye(NUM_NODES, NUM_FEATURES, dtype=jnp.float32)
    edge_index = make_edge_index(NUM_NODES)
    a_hat = build_norm_adj(edge_index, NUM_NODES)

    # Parameters (shapes from the module): GCNConv(34, 3) and Linear(3, 4).
    w1 = jax.random.normal(k1, (NUM_FEATURES, HIDDEN), jnp.float32) * 0.1
    b1 = jax.random.normal(k2, (HIDDEN,), jnp.float32) * 0.1
    w2 = jax.random.normal(k3, (HIDDEN, NUM_COUNTRIES), jnp.float32) * 0.1
    b2 = jax.random.normal(k4, (NUM_COUNTRIES,), jnp.float32) * 0.1

    # --- One-time init (hoisted out of the per-call path): pad + pack. -------
    a_pad = pad_a_hat(a_hat)
    wslab = build_wslab(w1, b1, w2, b2)                       # identity X: XW1 == W1
    slab_fast = jnp.concatenate([a_pad, wslab], axis=0)       # (168, 128), 1 DMA

    # Static non-identity X: precompute X @ W1 in the wrapper, reuse the fused
    # single-matmul kernel (general two-matmul kernel kept only for dynamic X).
    x_dense = jax.random.normal(k5, (NUM_NODES, NUM_FEATURES), jnp.float32) * 0.1
    wslab_dense = build_wslab(w1, b1, w2, b2, xw1=x_dense @ w1)
    slab_fast_dense = jnp.concatenate([a_pad, wslab_dense], axis=0)

    slab_gen = jnp.concatenate([a_pad, wslab, pad_x(x_dense)], axis=0)  # (296, 128)

    # --- Run kernels. ---------------------------------------------------------
    hz_id = gcn_forward_fused(slab_fast)           # identity X, fast path
    hz_dn = gcn_forward_fused(slab_fast_dense)     # static dense X, XW1 precomputed
    hz_gn = gcn_forward_general(slab_gen)          # dynamic X, two MXU passes
    jax.block_until_ready((hz_id, hz_dn, hz_gn))

    h_id, z_id = hz_id[:, :HIDDEN], hz_id[:, HIDDEN:]
    h_dn, z_dn = hz_dn[:, :HIDDEN], hz_dn[:, HIDDEN:]
    h_gn, z_gn = hz_gn[:, :HIDDEN], hz_gn[:, HIDDEN:]

    # --- Pure-JAX references. -------------------------------------------------
    def ref(xf):
        h_r = jnp.maximum(a_hat @ (xf @ w1) + b1[None, :], 0.0)
        return h_r, h_r @ w2 + b2[None, :]

    h_ref_id, z_ref_id = ref(x_id)
    h_ref_dn, z_ref_dn = ref(x_dense)

    assert h_id.shape == (NUM_NODES, HIDDEN) and z_id.shape == (NUM_NODES, NUM_COUNTRIES)
    assert jnp.allclose(h_id, h_ref_id, rtol=1e-4, atol=1e-4), "h mismatch (identity path)"
    assert jnp.allclose(z_id, z_ref_id, rtol=1e-4, atol=1e-4), "z mismatch (identity path)"
    assert jnp.allclose(h_dn, h_ref_dn, rtol=1e-4, atol=1e-4), "h mismatch (precomputed XW1)"
    assert jnp.allclose(z_dn, z_ref_dn, rtol=1e-4, atol=1e-4), "z mismatch (precomputed XW1)"
    assert jnp.allclose(h_gn, h_ref_dn, rtol=1e-4, atol=1e-4), "h mismatch (general path)"
    assert jnp.allclose(z_gn, z_ref_dn, rtol=1e-4, atol=1e-4), "z mismatch (general path)"

    print("KERNEL_OK")
</pallas_src>

<mosaic_0001>
module attributes {stable_mosaic.version = 11 : i64} {
  func.func @gcn_kernel_fused(%arg0: memref<168x128xf32, #tpu.memory_space<vmem>>, %arg1: memref<40x128xf32, #tpu.memory_space<vmem>>) attributes {dimension_semantics = [], scalar_prefetch = 0 : i64, scratch_operands = 0 : i64, tpu.core_type = #tpu.core_type<tc>} {
    %c0 = arith.constant 0 : index
    %c0_0 = arith.constant 0 : index
    %0 = vector.load %arg0[%c0, %c0_0] : memref<168x128xf32, #tpu.memory_space<vmem>>, vector<40x128xf32>
    %c40 = arith.constant 40 : index
    %c0_1 = arith.constant 0 : index
    %1 = vector.load %arg0[%c40, %c0_1] : memref<168x128xf32, #tpu.memory_space<vmem>>, vector<128x128xf32>
    %cst = arith.constant dense<0.000000e+00> : vector<40x128xf32>
    %2 = tpu.matmul %0, %1, %cst {dimension_numbers = #tpu.dot_dimension_numbers<[1], [0], [0], [1], [0, 0, 1, 1], [], []>} : vector<40x128xf32>, vector<128x128xf32>, vector<40x128xf32> -> vector<40x128xf32>
    %c104 = arith.constant 104 : index
    %c0_2 = arith.constant 0 : index
    %3 = vector.load %arg0[%c104, %c0_2] : memref<168x128xf32, #tpu.memory_space<vmem>>, vector<1x128xf32>
    %4 = vector.shape_cast %3 : vector<1x128xf32> to vector<128xf32>
    %5 = vector.shape_cast %4 : vector<128xf32> to vector<1x128xf32>
    %6 = vector.broadcast %5 : vector<1x128xf32> to vector<40x128xf32>
    %7 = arith.addf %2, %6 : vector<40x128xf32>
    %cst_3 = arith.constant 0.000000e+00 : f32
    %8 = vector.broadcast %cst_3 : f32 to vector<40x128xf32>
    %9 = arith.maximumf %7, %8 : vector<40x128xf32>
    %c112 = arith.constant 112 : index
    %c0_4 = arith.constant 0 : index
    %10 = vector.load %arg0[%c112, %c0_4] : memref<168x128xf32, #tpu.memory_space<vmem>>, vector<1x128xf32>
    %11 = vector.shape_cast %10 : vector<1x128xf32> to vector<128xf32>
    %12 = vector.shape_cast %11 : vector<128xf32> to vector<1x128xf32>
    %13 = vector.shape_cast %12 : vector<1x128xf32> to vector<1x128xf32>
    %14 = vector.broadcast %13 : vector<1x128xf32> to vector<40x128xf32>
    %15 = vector.extract_strided_slice %9 {offsets = [0, 0], sizes = [40, 1], strides = [1, 1]} : vector<40x128xf32> to vector<40x1xf32>
    %c80 = arith.constant 80 : index
    %c0_5 = arith.constant 0 : index
    %16 = vector.load %arg0[%c80, %c0_5] : memref<168x128xf32, #tpu.memory_space<vmem>>, vector<1x128xf32>
    %17 = vector.shape_cast %16 : vector<1x128xf32> to vector<128xf32>
    %18 = vector.shape_cast %17 : vector<128xf32> to vector<1x128xf32>
    %19 = vector.broadcast %15 : vector<40x1xf32> to vector<40x128xf32>
    %20 = vector.broadcast %18 : vector<1x128xf32> to vector<40x128xf32>
    %21 = arith.mulf %19, %20 : vector<40x128xf32>
    %22 = arith.addf %14, %21 : vector<40x128xf32>
    %23 = vector.extract_strided_slice %9 {offsets = [0, 1], sizes = [40, 1], strides = [1, 1]} : vector<40x128xf32> to vector<40x1xf32>
    %c88 = arith.constant 88 : index
    %c0_6 = arith.constant 0 : index
    %24 = vector.load %arg0[%c88, %c0_6] : memref<168x128xf32, #tpu.memory_space<vmem>>, vector<1x128xf32>
    %25 = vector.shape_cast %24 : vector<1x128xf32> to vector<128xf32>
    %26 = vector.shape_cast %25 : vector<128xf32> to vector<1x128xf32>
    %27 = vector.broadcast %23 : vector<40x1xf32> to vector<40x128xf32>
    %28 = vector.broadcast %26 : vector<1x128xf32> to vector<40x128xf32>
    %29 = arith.mulf %27, %28 : vector<40x128xf32>
    %30 = arith.addf %22, %29 : vector<40x128xf32>
    %31 = vector.extract_strided_slice %9 {offsets = [0, 2], sizes = [40, 1], strides = [1, 1]} : vector<40x128xf32> to vector<40x1xf32>
    %c96 = arith.constant 96 : index
    %c0_7 = arith.constant 0 : index
    %32 = vector.load %arg0[%c96, %c0_7] : memref<168x128xf32, #tpu.memory_space<vmem>>, vector<1x128xf32>
    %33 = vector.shape_cast %32 : vector<1x128xf32> to vector<128xf32>
    %34 = vector.shape_cast %33 : vector<128xf32> to vector<1x128xf32>
    %35 = vector.broadcast %31 : vector<40x1xf32> to vector<40x128xf32>
    %36 = vector.broadcast %34 : vector<1x128xf32> to vector<40x128xf32>
    %37 = arith.mulf %35, %36 : vector<40x128xf32>
    %38 = arith.addf %30, %37 : vector<40x128xf32>
    %39 = arith.addf %9, %38 : vector<40x128xf32>
    %c0_8 = arith.constant 0 : index
    %c0_9 = arith.constant 0 : index
    %40 = vector.load %arg1[%c0_8, %c0_9] : memref<40x128xf32, #tpu.memory_space<vmem>>, vector<40x128xf32>
    tpu.vector_store %arg1[%c0_8, %c0_9], %39 {strides = array<i32>} : memref<40x128xf32, #tpu.memory_space<vmem>>, vector<40x128xf32>,
    return
  }
}

</mosaic_0001>

<llo_original>
// kernel: gcn_forward_fused.1
$region0: #{gcn_forward_fused.1}
  #allocation0 [shape = 'u32[]', space=smem, size = 0x4, offset = 0x4, fixed_abs, tag = 'smem constant byte address 0x4 - core index']
  #allocation1 [shape = 'u32[72,128]{1,0:T(1,128)}', space=vmem, size = 0x9000, scoped, tag = 'internal scratch']
  %s0 = inlined_call_operand.hbm [shape: f32[168,128], index: 0, kind: input, shape index: {}]
  %s1 = inlined_call_operand.vmem [shape: f32[40,128], index: 1, kind: output, shape index: {}]
  %s2 = sld [smem:[#allocation0]]
  $region18: #{gcn_forward_fused.1} parent=0
    _
  %s4 = ssub.s32 1, %s2
  %s5 = scalar_select 0, %s4, %s2
  $region1: #{gcn_forward_fused.1} parent=0
    #allocation2 [shape = 'u8[86016]{0}', space=vmem, size = 0x15000, scoped, tag = 'input window, operand 0, single buffered']
    #allocation3 [shape = 's32[1]{0}', space=sflag, size = 0x4, scoped, tag = 'scoped memory for gcn_forward_fused.1']
    %6 = vsyncpa [#allocation3], 0
    // Predicated region
    $region2: #{gcn_forward_fused.1} parent=1 // pred_check
      _
    $region3: #{gcn_forward_fused.1} parent=1 // pred_check_branch
      %8 = sbr.rel (0) target = $region5
    $region4: #{gcn_forward_fused.1} parent=1 // pred_region
      %10 = vsyncadd [#allocation3], 0
      %s11 = sshll.u32 %s0, 4
      %s12 = int_to_ptr.hbm [resolvable:$true] %s11
      %s13 = sshll.u32 [#allocation2], 4
      %s14 = int_to_ptr.vmem [resolvable:$true] %s13
      %19 = dma.hbm_to_vmem [thread:$0]  %s12, 2688, %s14, [#allocation3], 128, 128, 8
    $region5: #{gcn_forward_fused.1} parent=1 // pred_fallthru
      _
    // Predicated region
    $region6: #{gcn_forward_fused.1} parent=1 // pred_check
      _
    $region7: #{gcn_forward_fused.1} parent=1 // pred_check_branch
      %21 = sbr.rel (0) target = $region9
    $region8: #{gcn_forward_fused.1} parent=1 // pred_region
      %23 = dma.done [#allocation3], 2688
    $region9: #{gcn_forward_fused.1} parent=1 // pred_fallthru
      _
    %v24 = vld [vmem:[#allocation2] sm:$0xff]
    %v25 = vld [vmem:[#allocation2 + $0x8] sm:$0xff]
    %v26 = vld [vmem:[#allocation2 + $0x10] sm:$0xff]
    %v27 = vld [vmem:[#allocation2 + $0x18] sm:$0xff]
    %v28 = vld [vmem:[#allocation2 + $0x20] sm:$0xff]
    %v29 = vld [vmem:[#allocation2 + $0x28] sm:$0xff]
    %v30 = vld [vmem:[#allocation2 + $0x30] sm:$0xff]
    %v31 = vld [vmem:[#allocation2 + $0x38] sm:$0xff]
    %v32 = vld [vmem:[#allocation2 + $0x40] sm:$0xff]
    %v33 = vld [vmem:[#allocation2 + $0x48] sm:$0xff]
    %v34 = vld [vmem:[#allocation2 + $0x50] sm:$0xff]
    %v35 = vld [vmem:[#allocation2 + $0x58] sm:$0xff]
    %v36 = vld [vmem:[#allocation2 + $0x60] sm:$0xff]
    %v37 = vld [vmem:[#allocation2 + $0x68] sm:$0xff]
    %v38 = vld [vmem:[#allocation2 + $0x70] sm:$0xff]
    %v39 = vld [vmem:[#allocation2 + $0x78] sm:$0xff]
    %v40 = vld [vmem:[#allocation2 + $0x80] sm:$0xff]
    %v41 = vld [vmem:[#allocation2 + $0x88] sm:$0xff]
    %v42 = vld [vmem:[#allocation2 + $0x90] sm:$0xff]
    %v43 = vld [vmem:[#allocation2 + $0x98] sm:$0xff]
    %v44 = vld [vmem:[#allocation2 + $0xa0] sm:$0xff]
    %v45 = vld [vmem:[#allocation2 + $0x68] sm:$0x1]
    %v46 = vperm.slane %v45, 0
    %47 = vmatpush.msra.mxu0 %v44
    %48 = vmatpush.msra.mxu0 %v43
    %49 = vmatpush.msra.mxu0 %v42
    %50 = vmatpush.msra.mxu0 %v41
    %51 = vmatpush.msra.mxu0 %v40
    %52 = vmatpush.msra.mxu0 %v39
    %53 = vmatpush.msra.mxu0 %v38
    %54 = vmatpush.msra.mxu0 %v37
    %55 = vmatpush.msra.mxu0 %v36
    %56 = vmatpush.msra.mxu0 %v35
    %57 = vmatpush.msra.mxu0 %v34
    %58 = vmatpush.msra.mxu0 %v33
    %59 = vmatpush.msra.mxu0 %v32
    %60 = vmatpush.msra.mxu0 %v31
    %61 = vmatpush.msra.mxu0 %v30
    %62 = vmatpush.msra.mxu0 %v29
    %63 = vmatmul.f32.gmra.mxu0 %v24
    %v64 = vpop.f32.mrf.mxu0
    %v65 = vadd.f32 %v46, %v64
    %66 = vmatmul.f32.gmra.mxu0 %v25
    %v67 = vpop.f32.mrf.mxu0
    %v68 = vadd.f32 %v46, %v67
    %69 = vmatmul.f32.gmra.mxu0 %v26
    %v70 = vpop.f32.mrf.mxu0
    %v71 = vadd.f32 %v46, %v70
    %72 = vmatmul.f32.gmra.mxu0 %v27
    %v73 = vpop.f32.mrf.mxu0
    %v74 = vadd.f32 %v46, %v73
    %75 = vmatmul.f32.gmra.mxu0 %v28
    %v76 = vpop.f32.mrf.mxu0
    %v77 = vadd.f32 %v46, %v76
    %78 = vdwg.mxu0
    %v79 = vmax.f32 %v65, 0.0
    %v80 = vmax.f32 %v68, 0.0
    %v81 = vmax.f32 %v71, 0.0
    %v82 = vmax.f32 %v74, 0.0
    %v83 = vmax.f32 %v77, 0.0
    %v84 = vld [vmem:[#allocation2 + $0x70] sm:$0x1]
    %v85 = vperm.slane %v84, 0
    %v86 = vld [vmem:[#allocation2 + $0x50] sm:$0x1]
    %88 = vset.pattern.permute.xlu0 0
    %89 = vperm.xlu0 %88, %v79
    %v90 = vpop.permute.xlu0 %89
    %93 = vset.pattern.permute.xlu0 0
    %94 = vperm.xlu0 %93, %v80
    %v95 = vpop.permute.xlu0 %94
    %98 = vset.pattern.permute.xlu0 0
    %99 = vperm.xlu0 %98, %v81
    %v100 = vpop.permute.xlu0 %99
    %103 = vset.pattern.permute.xlu0 0
    %104 = vperm.xlu0 %103, %v82
    %v105 = vpop.permute.xlu0 %104
    %108 = vset.pattern.permute.xlu0 0
    %109 = vperm.xlu0 %108, %v83
    %v110 = vpop.permute.xlu0 %109
    %v112 = vperm.slane %v86, 0
    %v113 = vmul.f32 %v90, %v112
    %v114 = vmul.f32 %v95, %v112
    %v115 = vmul.f32 %v100, %v112
    %v116 = vmul.f32 %v105, %v112
    %v117 = vmul.f32 %v110, %v112
    %v118 = vadd.f32 %v85, %v113
    %v119 = vadd.f32 %v85, %v114
    %v120 = vadd.f32 %v85, %v115
    %v121 = vadd.f32 %v85, %v116
    %v122 = vadd.f32 %v85, %v117
    %v123 = vld [vmem:[#allocation2 + $0x58] sm:$0x1]
    %124 = vset.pattern.permute.xlu0 1
    %125 = vperm.xlu0 %124, %v79
    %v126 = vpop.permute.xlu0 %125
    %128 = vset.pattern.permute.xlu0 1
    %129 = vperm.xlu0 %128, %v80
    %v130 = vpop.permute.xlu0 %129
    %132 = vset.pattern.permute.xlu0 1
    %133 = vperm.xlu0 %132, %v81
    %v134 = vpop.permute.xlu0 %133
    %136 = vset.pattern.permute.xlu0 1
    %137 = vperm.xlu0 %136, %v82
    %v138 = vpop.permute.xlu0 %137
    %140 = vset.pattern.permute.xlu0 1
    %141 = vperm.xlu0 %140, %v83
    %v142 = vpop.permute.xlu0 %141
    %v144 = vperm.slane %v123, 0
    %v145 = vmul.f32 %v126, %v144
    %v146 = vmul.f32 %v130, %v144
    %v147 = vmul.f32 %v134, %v144
    %v148 = vmul.f32 %v138, %v144
    %v149 = vmul.f32 %v142, %v144
    %v150 = vadd.f32 %v118, %v145
    %v151 = vadd.f32 %v119, %v146
    %v152 = vadd.f32 %v120, %v147
    %v153 = vadd.f32 %v121, %v148
    %v154 = vadd.f32 %v122, %v149
    %v155 = vld [vmem:[#allocation2 + $0x60] sm:$0x1]
    %156 = vset.pattern.permute.xlu0 2
    %157 = vperm.xlu0 %156, %v79
    %v158 = vpop.permute.xlu0 %157
    %160 = vset.pattern.permute.xlu0 2
    %161 = vperm.xlu0 %160, %v80
    %v162 = vpop.permute.xlu0 %161
    %164 = vset.pattern.permute.xlu0 2
    %165 = vperm.xlu0 %164, %v81
    %v166 = vpop.permute.xlu0 %165
    %168 = vset.pattern.permute.xlu0 2
    %169 = vperm.xlu0 %168, %v82
    %v170 = vpop.permute.xlu0 %169
    %172 = vset.pattern.permute.xlu0 2
    %173 = vperm.xlu0 %172, %v83
    %v174 = vpop.permute.xlu0 %173
    %v176 = vperm.slane %v155, 0
    %v177 = vmul.f32 %v158, %v176
    %v178 = vmul.f32 %v162, %v176
    %v179 = vmul.f32 %v166, %v176
    %v180 = vmul.f32 %v170, %v176
    %v181 = vmul.f32 %v174, %v176
    %v182 = vadd.f32 %v150, %v177
    %v183 = vadd.f32 %v151, %v178
    %v184 = vadd.f32 %v152, %v179
    %v185 = vadd.f32 %v153, %v180
    %v186 = vadd.f32 %v154, %v181
    %v187 = vadd.f32 %v79, %v182
    %v188 = vadd.f32 %v80, %v183
    %v189 = vadd.f32 %v81, %v184
    %v190 = vadd.f32 %v82, %v185
    %v191 = vadd.f32 %v83, %v186
    %192 = vst [vmem:[%s1] sm:$0xff] %v187
    %193 = vst [vmem:[%s1 + $0x8] sm:$0xff] %v188
    %194 = vst [vmem:[%s1 + $0x10] sm:$0xff] %v189
    %195 = vst [vmem:[%s1 + $0x18] sm:$0xff] %v190
    %196 = vst [vmem:[%s1 + $0x20] sm:$0xff] %v191
    // Predicated region
    $region10: #{gcn_forward_fused.1} parent=1 // pred_check
      _
    $region11: #{gcn_forward_fused.1} parent=1 // pred_check_branch
      %198 = sbr.rel (0) target = $region13
    $region12: #{gcn_forward_fused.1} parent=1 // pred_region
      _
    $region13: #{gcn_forward_fused.1} parent=1 // pred_fallthru
      _
    // Predicated region
    $region14: #{gcn_forward_fused.1} parent=1 // pred_check
      _
    $region15: #{gcn_forward_fused.1} parent=1 // pred_check_branch
      %200 = sbr.rel (0) target = $region17
    $region16: #{gcn_forward_fused.1} parent=1 // pred_region
      _
    $region17: #{gcn_forward_fused.1} parent=1 // pred_fallthru
      _
    %201 = vsyncpa [#allocation3], 1

</llo_original>
